<compile_context>
chip_gen: v7x
topology: tpu7x:2x2x1
jax: 0.10.0
libtpu: 0.0.40
codegen_flags: <defaults>
</compile_context>

<pallas_src>
import jax
import jax.numpy as jnp
from jax.experimental import pallas as pl
from jax.experimental.pallas import tpu as pltpu


def _round_up(x, m):
    return ((x + m - 1) // m) * m


# ----------------------------------------------------------------------------
# Fused decoder kernel: one MXU matmul + bias add + one lane-dense store.
# (linear, channel-major reshape and 1x1x1 conv are all folded into W_fused.)
# ----------------------------------------------------------------------------
def _decoder_fused_kernel(z_ref, w_ref, b_ref, o_ref):
    z = z_ref[...].astype(w_ref.dtype)                       # (TB, L) -> bf16
    h = jnp.dot(z, w_ref[...], preferred_element_type=jnp.float32)  # (TB, Npad) f32
    o_ref[...] = (h + b_ref[...]).astype(o_ref.dtype)        # single unmasked store


def decoder_forward_pallas(z, w_fused, b_fused, *, out_channels, min_dim):
    """Fused Decoder forward.

    z:        (B, L)        f32
    w_fused:  (L, Npad)     bf16  (conv folded in, columns zero-padded to 128-mult)
    b_fused:  (1, Npad)     f32   (lin_b folded through conv + conv_b, zero-padded)
    returns   (B, out_channels, min_dim, min_dim, min_dim) f32
    """
    B, L = z.shape
    V = min_dim ** 3
    n_real = out_channels * V
    Lw, Npad = w_fused.shape
    assert Lw == L and b_fused.shape == (1, Npad) and Npad >= n_real

    # Batch tiling: up to 256 rows per grid step; pad B so the tile divides it.
    TB = min(256, _round_up(B, 8))
    B_pad = _round_up(B, TB)
    if B_pad != B:
        z = jnp.pad(z, ((0, B_pad - B), (0, 0)))

    out2d = pl.pallas_call(
        _decoder_fused_kernel,
        out_shape=jax.ShapeDtypeStruct((B_pad, Npad), jnp.float32),
        grid_spec=pltpu.PrefetchScalarGridSpec(
            num_scalar_prefetch=0,
            grid=(B_pad // TB,),
            in_specs=[
                pl.BlockSpec((TB, L), lambda i: (i, 0)),     # z tile (over batch)
                pl.BlockSpec((L, Npad), lambda i: (0, 0)),   # fused weight, resident
                pl.BlockSpec((1, Npad), lambda i: (0, 0)),   # fused bias, resident
            ],
            out_specs=pl.BlockSpec((TB, Npad), lambda i: (i, 0)),
        ),
        compiler_params=pltpu.CompilerParams(
            dimension_semantics=("parallel",)),               # megacore on v7x
    )(z, w_fused, b_fused)

    # Columns [0, n_real) are already the channel-major flatten of
    # (B, Cout, m, m, m); the padded batch rows / lanes are dropped here.
    return out2d[:B, :n_real].reshape(B, out_channels, min_dim, min_dim, min_dim)


# ----------------------------------------------------------------------------
# Decoder wrapper with deterministic synthetic parameters + conv folding
# ----------------------------------------------------------------------------
class DecoderPallas:
    def __init__(self, key, *, latent_dim=128, dec_channels=8, out_channels=3,
                 min_dim=4, weight_dtype=jnp.bfloat16):
        self.min_dim = min_dim
        self.out_channels = out_channels
        V = min_dim ** 3
        ks = jax.random.split(key, 4)

        # Original ("torch") parameters, f32.
        # linear : nn.Linear(latent_dim, dec_channels * min_dim**3)
        self.lin_w = 0.05 * jax.random.normal(
            ks[0], (latent_dim, dec_channels * V), dtype=jnp.float32)
        self.lin_b = 0.05 * jax.random.normal(
            ks[1], (dec_channels * V,), dtype=jnp.float32)
        # net : Conv3d(dec_channels, out_channels, kernel_size=1), stored (Cin, Cout)
        self.conv_w = 0.1 * jax.random.normal(
            ks[2], (dec_channels, out_channels), dtype=jnp.float32)
        self.conv_b = 0.1 * jax.random.normal(
            ks[3], (out_channels,), dtype=jnp.float32)

        # Fold conv + both biases into the linear layer (f32 math), then cast the
        # fused weight to bf16 and zero-pad columns to a 128-lane multiple.
        n_real = out_channels * V
        n_pad = _round_up(n_real, 128)
        lw3 = self.lin_w.reshape(latent_dim, dec_channels, V)
        w_fused = jnp.einsum("lcv,co->lov", lw3, self.conv_w).reshape(latent_dim, n_real)
        b_fused = (jnp.einsum("cv,co->ov",
                              self.lin_b.reshape(dec_channels, V),
                              self.conv_w).reshape(n_real)
                   + jnp.repeat(self.conv_b, V))
        self.w_fused = jnp.pad(
            w_fused, ((0, 0), (0, n_pad - n_real))).astype(weight_dtype)
        self.b_fused = jnp.pad(
            b_fused, (0, n_pad - n_real)).reshape(1, n_pad).astype(jnp.float32)

    def forward(self, z):
        return decoder_forward_pallas(z, self.w_fused, self.b_fused,
                                      out_channels=self.out_channels,
                                      min_dim=self.min_dim)


# ----------------------------------------------------------------------------
if __name__ == "__main__":
    key = jax.random.PRNGKey(0)
    k_params, k_z, k_z2 = jax.random.split(key, 3)

    latent_dim, dec_channels, out_channels, min_dim = 128, 8, 3, 4
    V = min_dim ** 3
    model = DecoderPallas(k_params, latent_dim=latent_dim,
                          dec_channels=dec_channels,
                          out_channels=out_channels, min_dim=min_dim)

    def reference(z):
        # Plain-JAX reference of the ORIGINAL (unfused) module with f32 weights;
        # z rounded to bf16 to match the kernel's MXU input cast.
        B = z.shape[0]
        zr = z.astype(jnp.bfloat16).astype(jnp.float32)
        h = zr @ model.lin_w + model.lin_b                     # self.linear(x)
        h = h.reshape(B, dec_channels, V)                      # x.reshape(B,-1,m,m,m)
        out = (jnp.einsum("bcv,co->bov", h, model.conv_w)      # self.net(x): 1x1x1 conv
               + model.conv_b[None, :, None])
        return out.reshape(B, out_channels, min_dim, min_dim, min_dim)

    # Small-batch check (B=2, single grid step, padded batch rows).
    z = jax.random.normal(k_z, (2, latent_dim), dtype=jnp.float32)
    x_hat = model.forward(z)
    jax.block_until_ready(x_hat)
    ref = reference(z)
    assert x_hat.shape == (2, out_channels, min_dim, min_dim, min_dim)
    assert jnp.all(jnp.isfinite(x_hat))
    assert jnp.allclose(x_hat, ref, atol=1e-2, rtol=1e-2), \
        float(jnp.max(jnp.abs(x_hat - ref)))

    # Larger batch to exercise the multi-step batch grid + resident weight block.
    z2 = jax.random.normal(k_z2, (260, latent_dim), dtype=jnp.float32)
    x_hat2 = model.forward(z2)
    jax.block_until_ready(x_hat2)
    ref2 = reference(z2)
    assert x_hat2.shape == (260, out_channels, min_dim, min_dim, min_dim)
    assert jnp.allclose(x_hat2, ref2, atol=1e-2, rtol=1e-2), \
        float(jnp.max(jnp.abs(x_hat2 - ref2)))

    print("KERNEL_OK")
</pallas_src>

<mosaic_0001>
module attributes {stable_mosaic.version = 11 : i64} {
  func.func @_decoder_fused_kernel(%arg0: i32, %arg1: memref<8x128xf32, #tpu.memory_space<vmem>>, %arg2: memref<128x256xbf16, #tpu.memory_space<vmem>>, %arg3: memref<1x256xf32, #tpu.memory_space<vmem>>, %arg4: memref<8x256xf32, #tpu.memory_space<vmem>>) attributes {dimension_semantics = [#tpu.dimension_semantics<parallel>], iteration_bounds = array<i64: 1>, scalar_prefetch = 0 : i64, scratch_operands = 0 : i64, tpu.core_type = #tpu.core_type<tc>, window_params = [{transform_indices = @transform_0, window_bounds = array<i64: 8, 128>}, {pipeline_mode = #tpu.pipeline_mode<synchronous>, transform_indices = @transform_1, window_bounds = array<i64: 128, 256>}, {pipeline_mode = #tpu.pipeline_mode<synchronous>, transform_indices = @transform_2, window_bounds = array<i64: 1, 256>}, {transform_indices = @transform_3, window_bounds = array<i64: 8, 256>}]} {
    %c0 = arith.constant 0 : index
    %c0_0 = arith.constant 0 : index
    %0 = vector.load %arg1[%c0, %c0_0] : memref<8x128xf32, #tpu.memory_space<vmem>>, vector<8x128xf32>
    %1 = arith.truncf %0 : vector<8x128xf32> to vector<8x128xbf16>
    %c0_1 = arith.constant 0 : index
    %c0_2 = arith.constant 0 : index
    %2 = vector.load %arg2[%c0_1, %c0_2] : memref<128x256xbf16, #tpu.memory_space<vmem>>, vector<128x256xbf16>
    %cst = arith.constant dense<0.000000e+00> : vector<8x256xf32>
    %3 = tpu.matmul %1, %2, %cst {dimension_numbers = #tpu.dot_dimension_numbers<[1], [0], [0], [1], [0, 0, 1, 1], [], []>} : vector<8x128xbf16>, vector<128x256xbf16>, vector<8x256xf32> -> vector<8x256xf32>
    %c0_3 = arith.constant 0 : index
    %c0_4 = arith.constant 0 : index
    %4 = vector.load %arg3[%c0_3, %c0_4] : memref<1x256xf32, #tpu.memory_space<vmem>>, vector<1x256xf32>
    %5 = vector.broadcast %4 : vector<1x256xf32> to vector<8x256xf32>
    %6 = arith.addf %3, %5 : vector<8x256xf32>
    %c0_5 = arith.constant 0 : index
    %c0_6 = arith.constant 0 : index
    %7 = vector.load %arg4[%c0_5, %c0_6] : memref<8x256xf32, #tpu.memory_space<vmem>>, vector<8x256xf32>
    tpu.vector_store %arg4[%c0_5, %c0_6], %6 {strides = array<i32>} : memref<8x256xf32, #tpu.memory_space<vmem>>, vector<8x256xf32>,
    return
  }
  func.func @transform_0(%arg0: i32) -> (i32, i32) {
    %c0_i32 = arith.constant 0 : i32
    %c0_i32_0 = arith.constant 0 : i32
    return %arg0, %c0_i32 : i32, i32
  }
  func.func @transform_1(%arg0: i32) -> (i32, i32) {
    %c0_i32 = arith.constant 0 : i32
    %c0_i32_0 = arith.constant 0 : i32
    %c0_i32_1 = arith.constant 0 : i32
    return %c0_i32, %c0_i32_0 : i32, i32
  }
  func.func @transform_2(%arg0: i32) -> (i32, i32) {
    %c0_i32 = arith.constant 0 : i32
    %c0_i32_0 = arith.constant 0 : i32
    %c0_i32_1 = arith.constant 0 : i32
    return %c0_i32, %c0_i32_0 : i32, i32
  }
  func.func @transform_3(%arg0: i32) -> (i32, i32) {
    %c0_i32 = arith.constant 0 : i32
    %c0_i32_0 = arith.constant 0 : i32
    return %arg0, %c0_i32 : i32, i32
  }
}

</mosaic_0001>

<llo_original>
// kernel: tpu_custom_call.1
$region0: #{tpu_custom_call.1}
  #allocation0 [shape = 'u32[]', space=smem, size = 0x4, offset = 0x4, fixed_abs, tag = 'smem constant byte address 0x4 - core index']
  #allocation1 [shape = 'u32[144,128]{1,0:T(1,128)}', space=vmem, size = 0x12000, scoped, tag = 'internal scratch']
  %s0 = inlined_call_operand.hbm [shape: f32[8,128], index: 0, kind: input, shape index: {}]
  %s1 = inlined_call_operand.hbm [shape: bf16[128,256], index: 1, kind: input, shape index: {}]
  %s2 = inlined_call_operand.vmem [shape: f32[1,256], index: 2, kind: input, shape index: {}]
  %s3 = inlined_call_operand.hbm [shape: f32[8,256], index: 3, kind: output, shape index: {}]
  %s4 = sld [smem:[#allocation0]]
  $region30: #{tpu_custom_call.1} parent=0
    _
  %s6 = ssub.s32 1, %s4
  %s7 = scalar_select 0, %s6, %s4
  $region1: #{tpu_custom_call.1} parent=0
    #allocation2 [shape = 'u8[4096]{0}', space=vmem, size = 0x1000, scoped, tag = 'input window, operand 0, single buffered']
    #allocation3 [shape = 's32[1]{0}', space=sflag, size = 0x4, scoped, tag = 'scoped memory for tpu_custom_call.1']
    #allocation4 [shape = 's32[1]{0}', space=sflag, size = 0x4, scoped, tag = 'scoped memory for tpu_custom_call.1']
    #allocation5 [shape = 'u8[65536]{0}', space=vmem, size = 0x10000, scoped, tag = 'input window, operand 1, single buffered']
    #allocation6 [shape = 's32[1]{0}', space=sflag, size = 0x4, scoped, tag = 'scoped memory for tpu_custom_call.1']
    #allocation7 [shape = 'u8[8192]{0}', space=vmem, size = 0x2000, scoped, tag = 'output window, operand 0, single buffered']
    %8 = vsyncpa [#allocation3], 0
    %9 = vsyncpa [#allocation6], 0
    %10 = vsyncpa [#allocation4], 0
    // Predicated region
    $region2: #{tpu_custom_call.1} parent=1 // pred_check
      _
    $region3: #{tpu_custom_call.1} parent=1 // pred_check_branch
      %12 = sbr.rel (0) target = $region5
    $region4: #{tpu_custom_call.1} parent=1 // pred_region
      %s14 = ssub.s32 128, 128
      %15 = vsyncadd [#allocation3], %s14
      %s17 = sshll.u32 [#allocation2], 4
      %s18 = int_to_ptr.vmem [resolvable:$true] %s17
      %20 = dma.hbm_to_vmem [thread:$0]  %s0, 128, %s18, [#allocation3]
    $region5: #{tpu_custom_call.1} parent=1 // pred_fallthru
      _
    // Predicated region
    $region6: #{tpu_custom_call.1} parent=1 // pred_check
      _
    $region7: #{tpu_custom_call.1} parent=1 // pred_check_branch
      %22 = sbr.rel (0) target = $region9
    $region8: #{tpu_custom_call.1} parent=1 // pred_region
      %s24 = ssub.s32 2048, 2048
      %25 = vsyncadd [#allocation6], %s24
      %s26 = sshll.u32 [#allocation5], 4
      %s27 = int_to_ptr.vmem [resolvable:$true] %s26
      %32 = dma.hbm_to_vmem [thread:$0]  %s1, 2048, %s27, [#allocation6], 128, 128, 8
    $region9: #{tpu_custom_call.1} parent=1 // pred_fallthru
      _
    // Predicated region
    $region10: #{tpu_custom_call.1} parent=1 // pred_check
      _
    $region11: #{tpu_custom_call.1} parent=1 // pred_check_branch
      %34 = sbr.rel (0) target = $region13
    $region12: #{tpu_custom_call.1} parent=1 // pred_region
      _
    $region13: #{tpu_custom_call.1} parent=1 // pred_fallthru
      _
    // Predicated region
    $region14: #{tpu_custom_call.1} parent=1 // pred_check
      _
    $region15: #{tpu_custom_call.1} parent=1 // pred_check_branch
      %36 = sbr.rel (0) target = $region17
    $region16: #{tpu_custom_call.1} parent=1 // pred_region
      %37 = dma.done [#allocation3], 128
    $region17: #{tpu_custom_call.1} parent=1 // pred_fallthru
      _
    // Predicated region
    $region18: #{tpu_custom_call.1} parent=1 // pred_check
      _
    $region19: #{tpu_custom_call.1} parent=1 // pred_check_branch
      %39 = sbr.rel (0) target = $region21
    $region20: #{tpu_custom_call.1} parent=1 // pred_region
      %40 = dma.done [#allocation6], 2048
    $region21: #{tpu_custom_call.1} parent=1 // pred_fallthru
      _
    %v42 = vld [vmem:[#allocation2] sm:$0xff]
    %v43 = vpack.c.bf16 %v42, %v42
    %v44 = vld [vmem:[#allocation5] sm:$0xff]
    %v45 = vld [vmem:[#allocation5 + $0x8] sm:$0xff]
    %v46 = vld [vmem:[#allocation5 + $0x10] sm:$0xff]
    %v47 = vld [vmem:[#allocation5 + $0x18] sm:$0xff]
    %v48 = vld [vmem:[#allocation5 + $0x20] sm:$0xff]
    %v49 = vld [vmem:[#allocation5 + $0x28] sm:$0xff]
    %v50 = vld [vmem:[#allocation5 + $0x30] sm:$0xff]
    %v51 = vld [vmem:[#allocation5 + $0x38] sm:$0xff]
    %v52 = vld [vmem:[#allocation5 + $0x40] sm:$0xff]
    %v53 = vld [vmem:[#allocation5 + $0x48] sm:$0xff]
    %v54 = vld [vmem:[#allocation5 + $0x50] sm:$0xff]
    %v55 = vld [vmem:[#allocation5 + $0x58] sm:$0xff]
    %v56 = vld [vmem:[#allocation5 + $0x60] sm:$0xff]
    %v57 = vld [vmem:[#allocation5 + $0x68] sm:$0xff]
    %v58 = vld [vmem:[#allocation5 + $0x70] sm:$0xff]
    %v59 = vld [vmem:[#allocation5 + $0x78] sm:$0xff]
    %v60 = vld [vmem:[%s2] sm:$0x3]
    %v62 = vlaneseq
    %v63 = vshrl.u32 %v62, 7
    %v64 = vsub.s32 0, %v63
    %v65 = vrot.slane %v60, %v64
    %v66 = vlaneseq
    %v67 = vshrl.u32 %v66, 7
    %v68 = vsub.s32 1, %v67
    %v69 = vrot.slane %v60, %v68
    %v88 = vunpack.c.l.b16 %v44
    %v89 = vunpack.c.h.b16 %v44
    %v90 = vunpack.c.l.b16 %v45
    %v91 = vunpack.c.h.b16 %v45
    %v92 = vunpack.c.l.b16 %v46
    %v93 = vunpack.c.h.b16 %v46
    %v94 = vunpack.c.l.b16 %v47
    %v95 = vunpack.c.h.b16 %v47
    %v96 = vunpack.c.l.b16 %v48
    %v97 = vunpack.c.h.b16 %v48
    %v98 = vunpack.c.l.b16 %v49
    %v99 = vunpack.c.h.b16 %v49
    %v100 = vunpack.c.l.b16 %v50
    %v101 = vunpack.c.h.b16 %v50
    %v102 = vunpack.c.l.b16 %v51
    %v103 = vunpack.c.h.b16 %v51
    %v104 = vunpack.c.l.b16 %v52
    %v105 = vunpack.c.h.b16 %v52
    %v106 = vunpack.c.l.b16 %v53
    %v107 = vunpack.c.h.b16 %v53
    %v108 = vunpack.c.l.b16 %v54
    %v109 = vunpack.c.h.b16 %v54
    %v110 = vunpack.c.l.b16 %v55
    %v111 = vunpack.c.h.b16 %v55
    %v112 = vunpack.c.l.b16 %v56
    %v113 = vunpack.c.h.b16 %v56
    %v114 = vunpack.c.l.b16 %v57
    %v115 = vunpack.c.h.b16 %v57
    %v116 = vunpack.c.l.b16 %v58
    %v117 = vunpack.c.h.b16 %v58
    %v118 = vunpack.c.l.b16 %v59
    %v119 = vunpack.c.h.b16 %v59
    %v120 = vpack.c.b16 %v90, %v88
    %v121 = vpack.c.b16 %v91, %v89
    %v122 = vpack.c.b16 %v94, %v92
    %v123 = vpack.c.b16 %v95, %v93
    %v124 = vpack.c.b16 %v98, %v96
    %v125 = vpack.c.b16 %v99, %v97
    %v126 = vpack.c.b16 %v102, %v100
    %v127 = vpack.c.b16 %v103, %v101
    %v128 = vpack.c.b16 %v106, %v104
    %v129 = vpack.c.b16 %v107, %v105
    %v130 = vpack.c.b16 %v110, %v108
    %v131 = vpack.c.b16 %v111, %v109
    %v132 = vpack.c.b16 %v114, %v112
    %v133 = vpack.c.b16 %v115, %v113
    %v134 = vpack.c.b16 %v118, %v116
    %v135 = vpack.c.b16 %v119, %v117
    %152 = vmatprep.subr.bf16.mxu0 %v121
    %153 = vmatpush1.bf16.msra.mxu0 %v120
    %154 = vmatprep.subr.bf16.mxu0 %v123
    %155 = vmatpush1.bf16.msra.mxu0 %v122
    %156 = vmatprep.subr.bf16.mxu0 %v125
    %157 = vmatpush1.bf16.msra.mxu0 %v124
    %158 = vmatprep.subr.bf16.mxu0 %v127
    %159 = vmatpush1.bf16.msra.mxu0 %v126
    %160 = vmatprep.subr.bf16.mxu0 %v129
    %161 = vmatpush1.bf16.msra.mxu0 %v128
    %162 = vmatprep.subr.bf16.mxu0 %v131
    %163 = vmatpush1.bf16.msra.mxu0 %v130
    %164 = vmatprep.subr.bf16.mxu0 %v133
    %165 = vmatpush1.bf16.msra.mxu0 %v132
    %166 = vmatprep.subr.bf16.mxu0 %v135
    %167 = vmatpush1.bf16.msra.mxu0 %v134
    %168 = vmatprep.subr.bf16.mxu0 0
    %169 = vmatpush1.bf16.msra.mxu0 0
    %170 = vmatprep.subr.bf16.mxu0 0
    %171 = vmatpush1.bf16.msra.mxu0 0
    %172 = vmatprep.subr.bf16.mxu0 0
    %173 = vmatpush1.bf16.msra.mxu0 0
    %174 = vmatprep.subr.bf16.mxu0 0
    %175 = vmatpush1.bf16.msra.mxu0 0
    %176 = vmatprep.subr.bf16.mxu0 0
    %177 = vmatpush1.bf16.msra.mxu0 0
    %178 = vmatprep.subr.bf16.mxu0 0
    %179 = vmatpush1.bf16.msra.mxu0 0
    %180 = vmatprep.subr.bf16.mxu0 0
    %181 = vmatpush1.bf16.msra.mxu0 0
    %182 = vmatprep.subr.bf16.mxu0 0
    %183 = vmatpush1.bf16.msra.mxu0 0
    %184 = vmatprep.mubr.bf16.mxu0 0
    %185 = vmatmul.mubr.bf16.gmra.mrb[0].mxu0 %v43
    %v186 = vpop.f32.mrb[0].mxu0
    %v187 = vadd.f32 %v65, %v186
    %v188 = vpop.f32.mrb[0].mxu0
    %v189 = vadd.f32 %v69, %v188
    %v190 = vpop.f32.mrb[0].mxu0
    %v191 = vpop.f32.mrb[0].mxu0
    %192 = vdwg.mxu0
    %193 = vst [vmem:[#allocation7] sm:$0xff] %v187
    %194 = vst [vmem:[#allocation7 + $0x8] sm:$0xff] %v189
    // Predicated region
    $region22: #{tpu_custom_call.1} parent=1 // pred_check
      _
    $region23: #{tpu_custom_call.1} parent=1 // pred_check_branch
      %196 = sbr.rel (0) target = $region25
    $region24: #{tpu_custom_call.1} parent=1 // pred_region
      %s198 = ssub.s32 256, 256
      %199 = vsyncadd [#allocation4], %s198
      %s201 = sshll.u32 [#allocation7], 4
      %s202 = int_to_ptr.vmem [resolvable:$true] %s201
      %204 = dma.vmem_to_hbm [thread:$0]  %s202, 256, %s3, [#allocation4]
    $region25: #{tpu_custom_call.1} parent=1 // pred_fallthru
      _
    // Predicated region
    $region26: #{tpu_custom_call.1} parent=1 // pred_check
      _
    $region27: #{tpu_custom_call.1} parent=1 // pred_check_branch
      %206 = sbr.rel (0) target = $region29
    $region28: #{tpu_custom_call.1} parent=1 // pred_region
      %207 = dma.done [#allocation4], 256
    $region29: #{tpu_custom_call.1} parent=1 // pred_fallthru
      _
    %208 = vsyncpa [#allocation3], 1
    %209 = vsyncpa [#allocation6], 1
    %210 = vsyncpa [#allocation4], 1

</llo_original>
